<compile_context>
chip_gen: v7x
topology: tpu7x:2x2x1
jax: 0.10.0
libtpu: 0.0.40
codegen_flags: <defaults>
</compile_context>

<pallas_src>
import functools

import jax
import jax.numpy as jnp
from jax.experimental import pallas as pl
from jax.experimental.pallas import tpu as pltpu


def policy_kernel(x_ref, w1_ref, b1_ref, dw_ref, db_ref, o_ref):
    # x_ref : [Din, TB]  feature-major batch tile (lane-dense batch)
    # w1_ref: [H, Din]   fc1.weight, PyTorch layout
    # b1_ref: [H, 1]     fc1.bias (column)
    # dw_ref: [H, 1]     fc2.weight[1,:] - fc2.weight[0,:]  (column)
    # db_ref: [1, 1]     fc2.bias[1] - fc2.bias[0]          (SMEM scalar)
    # o_ref : [2, TB]    softmax probabilities, feature-major
    h_dim, din = w1_ref.shape
    w1 = w1_ref[...]                                       # [H, Din]

    # fc1 as Din unrolled VPU broadcast-FMA outer-product terms (no MXU).
    acc = w1[:, 0:1] * x_ref[0:1, :]                       # [H, TB]
    for k in range(1, din):
        acc = acc + w1[:, k:k + 1] * x_ref[k:k + 1, :]
    h = jnp.maximum(acc + b1_ref[...], 0.0)                # ReLU, [H, TB]

    # fc2 with Dout == 2: softmax([l0, l1]) == [1 - p1, p1],
    # p1 = sigmoid(l1 - l0).  Only the logit difference is needed.
    z = jnp.sum(dw_ref[...] * h, axis=0, keepdims=True) + db_ref[0, 0]  # [1, TB]

    # Numerically stable sigmoid: one EUP exp, no cross-lane reductions.
    e = jnp.exp(-jnp.abs(z))
    p_pos = 1.0 / (1.0 + e)
    p1 = jnp.where(z >= 0.0, p_pos, 1.0 - p_pos)           # [1, TB]
    o_ref[0:1, :] = 1.0 - p1                               # direct row stores,
    o_ref[1:2, :] = p1                                     # no concat temp


def _round_up(n, m):
    return ((n + m - 1) // m) * m


def _cdiv(a, b):
    return -(-a // b)


def _tensorcores_per_device():
    """Heuristic: chips whose 'parallel' grid axes shard across 2 TCs."""
    try:
        kind = jax.devices()[0].device_kind.lower()
    except Exception:  # pragma: no cover - defensive
        return 1
    return 2 if any(tag in kind for tag in ("v4", "v5p", "v7", "7x")) else 1


_NUM_TC = _tensorcores_per_device()


@functools.partial(jax.jit, static_argnames=("block_b", "min_pallas_batch"))
def policy_forward(x, w1, b1, w2, b2, *, block_b=16384, min_pallas_batch=256):
    """Forward pass of Policy (returns softmax probs, shape [B, 2]).

    x : [B, Din] f32 (batch-major, like the PyTorch module)
    w1: [H, Din], b1: [H]       (fc1.weight / fc1.bias, PyTorch layout)
    w2: [Dout, H], b2: [Dout]   (fc2.weight / fc2.bias), Dout must be 2
    block_b: max batch-tile width (multiple of 128).  Larger tiles amortize
             the fixed per-grid-step cost; >32768 may need more scoped VMEM.
    """
    B, din = x.shape
    H = w1.shape[0]
    dout = w2.shape[0]
    assert dout == 2, "kernel specializes the 2-class softmax to a sigmoid"
    assert block_b % 128 == 0 and block_b > 0

    if B < min_pallas_batch:
        # act()-style tiny batches: pallas launch + pad/transpose dominate;
        # a plain fused XLA matmul path is faster and numerically identical.
        h = jnp.maximum(x @ w1.T + b1, 0.0)
        return jax.nn.softmax(h @ w2.T + b2, axis=1)

    # Balanced, low-padding tile derivation (lane-dense batch, mult of 128).
    b128 = _round_up(B, 128)
    max_steps = b128 // 128                       # smallest legal tile is 128
    n_steps = min(max(_cdiv(b128, block_b), 1), max_steps)
    if _NUM_TC > 1:
        # Keep an even number of steps so the parallel axis load-balances
        # across both TensorCores (v7x / megacore chips).
        n_steps = min(_round_up(n_steps, _NUM_TC), max_steps)
    tb = _round_up(_cdiv(b128, n_steps), 128)     # per-step tile, <128 waste
    n_steps = _cdiv(b128, tb)
    pad_b = n_steps * tb

    # Feature-major, zero-padded batch.  With allow_input_fusion on operand 0
    # XLA may fuse this pad+transpose into the pallas_call input instead of
    # materializing an extra HBM copy of x.
    xt = jnp.pad(x, ((0, pad_b - B), (0, 0))).T            # [Din, pad_b]
    b1c = b1.reshape(H, 1)
    dw = (w2[1, :] - w2[0, :]).reshape(H, 1)               # fc2 weight diff
    db = (b2[1] - b2[0]).reshape(1, 1)                     # fc2 bias diff

    out = pl.pallas_call(
        policy_kernel,
        out_shape=jax.ShapeDtypeStruct((dout, pad_b), jnp.float32),
        grid=(n_steps,),
        in_specs=[
            pl.BlockSpec((din, tb), lambda i: (0, i)),     # x tile (pipelined)
            pl.BlockSpec((H, din), lambda i: (0, 0)),      # w1 (VMEM resident)
            pl.BlockSpec((H, 1), lambda i: (0, 0)),        # b1
            pl.BlockSpec((H, 1), lambda i: (0, 0)),        # dw
            pl.BlockSpec(memory_space=pltpu.MemorySpace.SMEM),  # db scalar
        ],
        out_specs=pl.BlockSpec((dout, tb), lambda i: (0, i)),
        compiler_params=pltpu.CompilerParams(
            dimension_semantics=("parallel",),             # shard over TCs
            allow_input_fusion=[True, False, False, False, False],
            vmem_limit_bytes=32 * 1024 * 1024,
        ),
    )(xt, w1, b1c, dw, db)

    return out[:, :B].T                                    # [B, Dout]


def init_policy_params(key, dim_input=4, dim_output=2, dim_hidden=20):
    """PyTorch nn.Linear default init: U(-1/sqrt(fan_in), 1/sqrt(fan_in))."""
    k1, k2, k3, k4 = jax.random.split(key, 4)
    bound1 = 1.0 / jnp.sqrt(jnp.float32(dim_input))
    bound2 = 1.0 / jnp.sqrt(jnp.float32(dim_hidden))
    w1 = jax.random.uniform(k1, (dim_hidden, dim_input), jnp.float32, -bound1, bound1)
    b1 = jax.random.uniform(k2, (dim_hidden,), jnp.float32, -bound1, bound1)
    w2 = jax.random.uniform(k3, (dim_output, dim_hidden), jnp.float32, -bound2, bound2)
    b2 = jax.random.uniform(k4, (dim_output,), jnp.float32, -bound2, bound2)
    return w1, b1, w2, b2


def policy_reference(x, w1, b1, w2, b2):
    h = jnp.maximum(x @ w1.T + b1, 0.0)
    return jax.nn.softmax(h @ w2.T + b2, axis=1)


if __name__ == "__main__":
    key = jax.random.PRNGKey(0)
    k_params, k_x, k_x2, k_x3 = jax.random.split(key, 4)

    B, DIM_IN, DIM_OUT, DIM_HID = 2, 4, 2, 20
    w1, b1, w2, b2 = init_policy_params(k_params, DIM_IN, DIM_OUT, DIM_HID)

    # 1) Tiny act()-style batch, forced through the Pallas kernel
    #    (exercises padding + single-step grid).
    x = jax.random.normal(k_x, (B, DIM_IN), jnp.float32)
    probs = jax.block_until_ready(
        policy_forward(x, w1, b1, w2, b2, min_pallas_batch=0))
    probs_ref = policy_reference(x, w1, b1, w2, b2)
    assert probs.shape == (B, DIM_OUT)
    assert jnp.allclose(probs, probs_ref, atol=1e-5), (probs, probs_ref)
    assert jnp.allclose(jnp.sum(probs, axis=1), 1.0, atol=1e-5)

    # 2) Same tiny batch via the default dispatch (small-B XLA fast path).
    probs_fast = jax.block_until_ready(policy_forward(x, w1, b1, w2, b2))
    assert jnp.allclose(probs_fast, probs_ref, atol=1e-5)

    # 3) Rollout-style batch with a deliberately small tile -> multi-step grid
    #    and a non-multiple-of-128 tail.
    B2 = 300
    x2 = jax.random.normal(k_x2, (B2, DIM_IN), jnp.float32)
    probs2 = jax.block_until_ready(
        policy_forward(x2, w1, b1, w2, b2, block_b=128, min_pallas_batch=0))
    probs2_ref = policy_reference(x2, w1, b1, w2, b2)
    assert probs2.shape == (B2, DIM_OUT)
    assert jnp.allclose(probs2, probs2_ref, atol=1e-5)
    assert jnp.allclose(jnp.sum(probs2, axis=1), 1.0, atol=1e-5)

    # 4) Larger rollout batch through the default large-tile configuration
    #    (balanced tile derivation, <128 padding, TC-aware step count).
    B3 = 5000
    x3 = jax.random.normal(k_x3, (B3, DIM_IN), jnp.float32)
    probs3 = jax.block_until_ready(policy_forward(x3, w1, b1, w2, b2))
    probs3_ref = policy_reference(x3, w1, b1, w2, b2)
    assert probs3.shape == (B3, DIM_OUT)
    assert jnp.allclose(probs3, probs3_ref, atol=1e-5)
    assert jnp.allclose(jnp.sum(probs3, axis=1), 1.0, atol=1e-5)

    print("KERNEL_OK")
</pallas_src>

<mosaic_0001>
module attributes {stable_mosaic.version = 11 : i64} {
  func.func @policy_kernel(%arg0: i32, %arg1: memref<4x128xf32, #tpu.memory_space<vmem>>, %arg2: memref<20x4xf32, #tpu.memory_space<vmem>>, %arg3: memref<20x1xf32, #tpu.memory_space<vmem>>, %arg4: memref<20x1xf32, #tpu.memory_space<vmem>>, %arg5: memref<1x1xf32, #tpu.memory_space<smem>>, %arg6: memref<2x128xf32, #tpu.memory_space<vmem>>) attributes {dimension_semantics = [#tpu.dimension_semantics<parallel>], iteration_bounds = array<i64: 1>, scalar_prefetch = 0 : i64, scratch_operands = 0 : i64, tpu.core_type = #tpu.core_type<tc>, window_params = [{transform_indices = @transform_0, window_bounds = array<i64: 4, 128>}, {pipeline_mode = #tpu.pipeline_mode<synchronous>, transform_indices = @transform_1, window_bounds = array<i64: 20, 4>}, {pipeline_mode = #tpu.pipeline_mode<synchronous>, transform_indices = @transform_2, window_bounds = array<i64: 20, 1>}, {pipeline_mode = #tpu.pipeline_mode<synchronous>, transform_indices = @transform_3, window_bounds = array<i64: 20, 1>}, {transform_indices = @transform_4, window_bounds = array<i64: 1, 1>}, {transform_indices = @transform_5, window_bounds = array<i64: 2, 128>}]} {
    %c0 = arith.constant 0 : index
    %c0_0 = arith.constant 0 : index
    %0 = vector.load %arg2[%c0, %c0_0] : memref<20x4xf32, #tpu.memory_space<vmem>>, vector<20x4xf32>
    %1 = vector.extract_strided_slice %0 {offsets = [0, 0], sizes = [20, 1], strides = [1, 1]} : vector<20x4xf32> to vector<20x1xf32>
    %c0_1 = arith.constant 0 : index
    %c0_2 = arith.constant 0 : index
    %2 = vector.load %arg1[%c0_1, %c0_2] : memref<4x128xf32, #tpu.memory_space<vmem>>, vector<1x128xf32>
    %3 = vector.broadcast %1 : vector<20x1xf32> to vector<20x128xf32>
    %4 = vector.broadcast %2 : vector<1x128xf32> to vector<20x128xf32>
    %5 = arith.mulf %3, %4 : vector<20x128xf32>
    %6 = vector.extract_strided_slice %0 {offsets = [0, 1], sizes = [20, 1], strides = [1, 1]} : vector<20x4xf32> to vector<20x1xf32>
    %c1 = arith.constant 1 : index
    %c0_3 = arith.constant 0 : index
    %7 = vector.load %arg1[%c1, %c0_3] : memref<4x128xf32, #tpu.memory_space<vmem>>, vector<1x128xf32>
    %8 = vector.broadcast %6 : vector<20x1xf32> to vector<20x128xf32>
    %9 = vector.broadcast %7 : vector<1x128xf32> to vector<20x128xf32>
    %10 = arith.mulf %8, %9 : vector<20x128xf32>
    %11 = arith.addf %5, %10 : vector<20x128xf32>
    %12 = vector.extract_strided_slice %0 {offsets = [0, 2], sizes = [20, 1], strides = [1, 1]} : vector<20x4xf32> to vector<20x1xf32>
    %c2 = arith.constant 2 : index
    %c0_4 = arith.constant 0 : index
    %13 = vector.load %arg1[%c2, %c0_4] : memref<4x128xf32, #tpu.memory_space<vmem>>, vector<1x128xf32>
    %14 = vector.broadcast %12 : vector<20x1xf32> to vector<20x128xf32>
    %15 = vector.broadcast %13 : vector<1x128xf32> to vector<20x128xf32>
    %16 = arith.mulf %14, %15 : vector<20x128xf32>
    %17 = arith.addf %11, %16 : vector<20x128xf32>
    %18 = vector.extract_strided_slice %0 {offsets = [0, 3], sizes = [20, 1], strides = [1, 1]} : vector<20x4xf32> to vector<20x1xf32>
    %c3 = arith.constant 3 : index
    %c0_5 = arith.constant 0 : index
    %19 = vector.load %arg1[%c3, %c0_5] : memref<4x128xf32, #tpu.memory_space<vmem>>, vector<1x128xf32>
    %20 = vector.broadcast %18 : vector<20x1xf32> to vector<20x128xf32>
    %21 = vector.broadcast %19 : vector<1x128xf32> to vector<20x128xf32>
    %22 = arith.mulf %20, %21 : vector<20x128xf32>
    %23 = arith.addf %17, %22 : vector<20x128xf32>
    %c0_6 = arith.constant 0 : index
    %c0_7 = arith.constant 0 : index
    %24 = vector.load %arg3[%c0_6, %c0_7] : memref<20x1xf32, #tpu.memory_space<vmem>>, vector<20x1xf32>
    %25 = vector.broadcast %24 : vector<20x1xf32> to vector<20x128xf32>
    %26 = arith.addf %23, %25 : vector<20x128xf32>
    %cst = arith.constant 0.000000e+00 : f32
    %27 = vector.broadcast %cst : f32 to vector<20x128xf32>
    %28 = arith.maximumf %26, %27 : vector<20x128xf32>
    %c0_8 = arith.constant 0 : index
    %c0_9 = arith.constant 0 : index
    %29 = vector.load %arg4[%c0_8, %c0_9] : memref<20x1xf32, #tpu.memory_space<vmem>>, vector<20x1xf32>
    %30 = vector.broadcast %29 : vector<20x1xf32> to vector<20x128xf32>
    %31 = arith.mulf %30, %28 : vector<20x128xf32>
    %cst_10 = arith.constant dense<0.000000e+00> : vector<128xf32>
    %32 = vector.multi_reduction <add>, %31, %cst_10 [0] : vector<20x128xf32> to vector<128xf32>
    %33 = vector.shape_cast %32 : vector<128xf32> to vector<1x128xf32>
    %c0_11 = arith.constant 0 : index
    %c0_12 = arith.constant 0 : index
    %34 = memref.load %arg5[%c0_11, %c0_12] : memref<1x1xf32, #tpu.memory_space<smem>>
    %35 = vector.broadcast %34 : f32 to vector<1x128xf32>
    %36 = arith.addf %33, %35 : vector<1x128xf32>
    %37 = math.absf %36 : vector<1x128xf32>
    %cst_13 = arith.constant 0.000000e+00 : f32
    %38 = vector.broadcast %cst_13 : f32 to vector<1x128xf32>
    %39 = arith.subf %38, %37 : vector<1x128xf32>
    %40 = math.exp %39 : vector<1x128xf32>
    %cst_14 = arith.constant 1.000000e+00 : f32
    %41 = vector.broadcast %cst_14 : f32 to vector<1x128xf32>
    %42 = arith.addf %41, %40 : vector<1x128xf32>
    %cst_15 = arith.constant 1.000000e+00 : f32
    %43 = vector.broadcast %cst_15 : f32 to vector<1x128xf32>
    %44 = arith.divf %43, %42 : vector<1x128xf32>
    %cst_16 = arith.constant 0.000000e+00 : f32
    %45 = vector.broadcast %cst_16 : f32 to vector<1x128xf32>
    %46 = arith.cmpf oge, %36, %45 : vector<1x128xf32>
    %cst_17 = arith.constant 1.000000e+00 : f32
    %47 = vector.broadcast %cst_17 : f32 to vector<1x128xf32>
    %48 = arith.subf %47, %44 : vector<1x128xf32>
    %49 = arith.select %46, %44, %48 : vector<1x128xi1>, vector<1x128xf32>
    %cst_18 = arith.constant 1.000000e+00 : f32
    %50 = vector.broadcast %cst_18 : f32 to vector<1x128xf32>
    %51 = arith.subf %50, %49 : vector<1x128xf32>
    %c0_19 = arith.constant 0 : index
    %c0_20 = arith.constant 0 : index
    %52 = vector.load %arg6[%c0_19, %c0_20] : memref<2x128xf32, #tpu.memory_space<vmem>>, vector<1x128xf32>
    tpu.vector_store %arg6[%c0_19, %c0_20], %51 {strides = array<i32>} : memref<2x128xf32, #tpu.memory_space<vmem>>, vector<1x128xf32>,
    %c1_21 = arith.constant 1 : index
    %c0_22 = arith.constant 0 : index
    %53 = vector.load %arg6[%c1_21, %c0_22] : memref<2x128xf32, #tpu.memory_space<vmem>>, vector<1x128xf32>
    tpu.vector_store %arg6[%c1_21, %c0_22], %49 {strides = array<i32>} : memref<2x128xf32, #tpu.memory_space<vmem>>, vector<1x128xf32>,
    return
  }
  func.func @transform_0(%arg0: i32) -> (i32, i32) {
    %c0_i32 = arith.constant 0 : i32
    %c0_i32_0 = arith.constant 0 : i32
    return %c0_i32, %arg0 : i32, i32
  }
  func.func @transform_1(%arg0: i32) -> (i32, i32) {
    %c0_i32 = arith.constant 0 : i32
    %c0_i32_0 = arith.constant 0 : i32
    %c0_i32_1 = arith.constant 0 : i32
    return %c0_i32, %c0_i32_0 : i32, i32
  }
  func.func @transform_2(%arg0: i32) -> (i32, i32) {
    %c0_i32 = arith.constant 0 : i32
    %c0_i32_0 = arith.constant 0 : i32
    %c0_i32_1 = arith.constant 0 : i32
    return %c0_i32, %c0_i32_0 : i32, i32
  }
  func.func @transform_3(%arg0: i32) -> (i32, i32) {
    %c0_i32 = arith.constant 0 : i32
    %c0_i32_0 = arith.constant 0 : i32
    %c0_i32_1 = arith.constant 0 : i32
    return %c0_i32, %c0_i32_0 : i32, i32
  }
  func.func @transform_4(%arg0: i32) -> (i32, i32) {
    %c0_i32 = arith.constant 0 : i32
    %c0_i32_0 = arith.constant 0 : i32
    %c0_i32_1 = arith.constant 0 : i32
    return %c0_i32, %c0_i32_0 : i32, i32
  }
  func.func @transform_5(%arg0: i32) -> (i32, i32) {
    %c0_i32 = arith.constant 0 : i32
    %c0_i32_0 = arith.constant 0 : i32
    return %c0_i32, %arg0 : i32, i32
  }
}

</mosaic_0001>

<llo_original>
// kernel: policy_forward.2
$region0: #{policy_forward.2}
  #allocation0 [shape = 'u32[]', space=smem, size = 0x4, offset = 0x4, fixed_abs, tag = 'smem constant byte address 0x4 - core index']
  #allocation1 [shape = 'u32[144,128]{1,0:T(1,128)}', space=vmem, size = 0x12000, scoped, tag = 'internal scratch']
  #allocation2 [shape = 'u32[2048]{0}', space=vmem, size = 0x2000, scoped, tag = 'scoped memory for policy_forward.2']
  #allocation3 [shape = 'u32[2048]{0}', space=vmem, size = 0x2000, scoped, tag = 'scoped memory for policy_forward.2']
  #allocation4 [shape = 'u32[2048]{0}', space=vmem, size = 0x2000, scoped, tag = 'scoped memory for policy_forward.2']
  #allocation5 [shape = 'u32[2048]{0}', space=vmem, size = 0x2000, scoped, tag = 'scoped memory for policy_forward.2']
  #allocation6 [shape = 'u32[2048]{0}', space=vmem, size = 0x2000, scoped, tag = 'scoped memory for policy_forward.2']
  #allocation7 [shape = 'f32[1,1]{1,0:T(1,128)S(6)}', space=smem, size = 0x200, scoped, tag = 'scoped memory for policy_forward.2']
  %s0 = inlined_call_operand.vmem [shape: f32[20,4], index: 0, kind: input, shape index: {}]
  %s1 = inlined_call_operand.vmem [shape: f32[20,1], index: 1, kind: input, shape index: {}]
  %s2 = inlined_call_operand.vmem [shape: f32[20,1], index: 2, kind: input, shape index: {}]
  %s3 = inlined_call_operand.<no memory space> [shape: f32[1,1], index: 3, kind: input, shape index: {}]
  %s4 = inlined_call_operand.vmem [shape: f32[2,4], index: 4, kind: input, shape index: {}]
  %s5 = inlined_call_operand.<no memory space> [shape: f32[], index: 5, kind: input, shape index: {}]
  %s6 = inlined_call_operand.vmem [shape: f32[2,128], index: 6, kind: output, shape index: {}]
  %s7 = sld [smem:[#allocation0]]
  $region30: #{policy_forward.2} parent=0
    _
  %s9 = ssub.s32 1, %s7
  %s10 = scalar_select 0, %s9, %s7
  %v11 = vstv %s5
  %12 = sst [smem:[#allocation7]] %s3
  $region1: #{policy_forward.2} parent=0
    #allocation8 [shape = 'u8[2048]{0}', space=vmem, size = 0x800, dematerialized = true, scoped, tag = 'FusionAdapter Buffer %fusion.1 = f32[4,128]{1,0:T(4,128)} fusion(%param_4.2, %param_5), kind=kLoop, calls=%fused_computation.1.clone, metadata={op_name="jit(policy_forward)/transpose" stack_frame_id=8}']
    // Predicated region
    $region2: #{policy_forward.2} parent=1 // pred_check
      _
    $region3: #{policy_forward.2} parent=1 // pred_check_branch
      %14 = sbr.rel (0) target = $region5
    $region4: #{policy_forward.2} parent=1 // pred_region
      _
    $region5: #{policy_forward.2} parent=1 // pred_fallthru
      _
    // Predicated region
    $region6: #{policy_forward.2} parent=1 // pred_check
      _
    $region7: #{policy_forward.2} parent=1 // pred_check_branch
      %16 = sbr.rel (0) target = $region9
    $region8: #{policy_forward.2} parent=1 // pred_region
      _
    $region9: #{policy_forward.2} parent=1 // pred_fallthru
      _
    // Predicated region
    $region10: #{policy_forward.2} parent=1 // pred_check
      _
    $region11: #{policy_forward.2} parent=1 // pred_check_branch
      %18 = sbr.rel (0) target = $region13
    $region12: #{policy_forward.2} parent=1 // pred_region
      _
    $region13: #{policy_forward.2} parent=1 // pred_fallthru
      _
    // Predicated region
    $region14: #{policy_forward.2} parent=1 // pred_check
      _
    $region15: #{policy_forward.2} parent=1 // pred_check_branch
      %20 = sbr.rel (0) target = $region17
    $region16: #{policy_forward.2} parent=1 // pred_region
      _
    $region17: #{policy_forward.2} parent=1 // pred_fallthru
      _
    // Predicated region
    $region18: #{policy_forward.2} parent=1 // pred_check
      _
    $region19: #{policy_forward.2} parent=1 // pred_check_branch
      %22 = sbr.rel (0) target = $region21
    $region20: #{policy_forward.2} parent=1 // pred_region
      _
    $region21: #{policy_forward.2} parent=1 // pred_fallthru
      _
    %v23 = vld [vmem:[%s4] sm:$0xf]
    %v24 = vlaneseq
    %v25 = vshrl.u32 %v24, 7
    %vm27 = vcmp.lt.s32.totalorder %v25, 4
    %v28 = vsel %vm27, %v23, %v11
    %v29 = vlaneseq
    %v30 = vand.u32 %v29, 127
    %vm32 = vcmp.lt.s32.totalorder %v30, 2
    %v33 = vsel %vm32, %v28, %v11
    %35 = vst [vmem:[#allocation8] sm:$0xf] %v33
    %v36 = vld [vmem:[%s0] sm:$0xff]
    %v37 = vld [vmem:[%s0 + $0x8] sm:$0xff]
    %v38 = vld [vmem:[%s0 + $0x10] sm:$0xf]
    %v39 = vld [vmem:[#allocation8] sm:$0x1]
    %41 = vset.pattern.permute.xlu0 0
    %42 = vperm.xlu0 %41, %v36
    %v43 = vpop.permute.xlu0 %42
    %46 = vset.pattern.permute.xlu0 0
    %47 = vperm.xlu0 %46, %v37
    %v48 = vpop.permute.xlu0 %47
    %51 = vset.pattern.permute.xlu0 0
    %52 = vperm.xlu0 %51, %v38
    %v53 = vpop.permute.xlu0 %52
    %v55 = vlaneseq
    %v56 = vshrl.u32 %v55, 7
    %v57 = vsub.s32 0, %v56
    %v58 = vrot.slane %v39, %v57
    %v59 = vmul.f32 %v43, %v58
    %v60 = vmul.f32 %v48, %v58
    %v61 = vmul.f32 %v53, %v58
    %v62 = vld [vmem:[#allocation8 + $0x1] sm:$0x1]
    %63 = vset.pattern.permute.xlu0 1
    %64 = vperm.xlu0 %63, %v36
    %v65 = vpop.permute.xlu0 %64
    %67 = vset.pattern.permute.xlu0 1
    %68 = vperm.xlu0 %67, %v37
    %v69 = vpop.permute.xlu0 %68
    %71 = vset.pattern.permute.xlu0 1
    %72 = vperm.xlu0 %71, %v38
    %v73 = vpop.permute.xlu0 %72
    %v75 = vlaneseq
    %v76 = vshrl.u32 %v75, 7
    %v77 = vsub.s32 0, %v76
    %v78 = vrot.slane %v62, %v77
    %v79 = vmul.f32 %v65, %v78
    %v80 = vmul.f32 %v69, %v78
    %v81 = vmul.f32 %v73, %v78
    %v82 = vadd.f32 %v59, %v79
    %v83 = vadd.f32 %v60, %v80
    %v84 = vadd.f32 %v61, %v81
    %v85 = vld [vmem:[#allocation8 + $0x2] sm:$0x1]
    %86 = vset.pattern.permute.xlu0 2
    %87 = vperm.xlu0 %86, %v36
    %v88 = vpop.permute.xlu0 %87
    %90 = vset.pattern.permute.xlu0 2
    %91 = vperm.xlu0 %90, %v37
    %v92 = vpop.permute.xlu0 %91
    %94 = vset.pattern.permute.xlu0 2
    %95 = vperm.xlu0 %94, %v38
    %v96 = vpop.permute.xlu0 %95
    %v98 = vlaneseq
    %v99 = vshrl.u32 %v98, 7
    %v100 = vsub.s32 0, %v99
    %v101 = vrot.slane %v85, %v100
    %v102 = vmul.f32 %v88, %v101
    %v103 = vmul.f32 %v92, %v101
    %v104 = vmul.f32 %v96, %v101
    %v105 = vadd.f32 %v82, %v102
    %v106 = vadd.f32 %v83, %v103
    %v107 = vadd.f32 %v84, %v104
    %v108 = vld [vmem:[#allocation8 + $0x3] sm:$0x1]
    %109 = vset.pattern.permute.xlu0 3
    %110 = vperm.xlu0 %109, %v36
    %v111 = vpop.permute.xlu0 %110
    %113 = vset.pattern.permute.xlu0 3
    %114 = vperm.xlu0 %113, %v37
    %v115 = vpop.permute.xlu0 %114
    %117 = vset.pattern.permute.xlu0 3
    %118 = vperm.xlu0 %117, %v38
    %v119 = vpop.permute.xlu0 %118
    %v121 = vlaneseq
    %v122 = vshrl.u32 %v121, 7
    %v123 = vsub.s32 0, %v122
    %v124 = vrot.slane %v108, %v123
    %v125 = vmul.f32 %v111, %v124
    %v126 = vmul.f32 %v115, %v124
    %v127 = vmul.f32 %v119, %v124
    %v128 = vadd.f32 %v105, %v125
    %v129 = vadd.f32 %v106, %v126
    %v130 = vadd.f32 %v107, %v127
    %v131 = vld [vmem:[%s1] sm:$0xff]
    %v132 = vld [vmem:[%s1 + $0x8] sm:$0xff]
    %v133 = vld [vmem:[%s1 + $0x10] sm:$0xf]
    %135 = vset.pattern.permute.xlu0 0
    %136 = vperm.xlu0 %135, %v131
    %v137 = vpop.permute.xlu0 %136
    %140 = vset.pattern.permute.xlu0 0
    %141 = vperm.xlu0 %140, %v132
    %v142 = vpop.permute.xlu0 %141
    %145 = vset.pattern.permute.xlu0 0
    %146 = vperm.xlu0 %145, %v133
    %v147 = vpop.permute.xlu0 %146
    %v149 = vadd.f32 %v128, %v137
    %v150 = vadd.f32 %v129, %v142
    %v151 = vadd.f32 %v130, %v147
    %v152 = vmax.f32 %v149, 0.0
    %v153 = vmax.f32 %v150, 0.0
    %v154 = vmax.f32 %v151, 0.0
    %v155 = vld [vmem:[%s2] sm:$0xff]
    %v156 = vld [vmem:[%s2 + $0x8] sm:$0xff]
    %v157 = vld [vmem:[%s2 + $0x10] sm:$0xf]
    %159 = vset.pattern.permute.xlu0 0
    %160 = vperm.xlu0 %159, %v155
    %v161 = vpop.permute.xlu0 %160
    %164 = vset.pattern.permute.xlu0 0
    %165 = vperm.xlu0 %164, %v156
    %v166 = vpop.permute.xlu0 %165
    %169 = vset.pattern.permute.xlu0 0
    %170 = vperm.xlu0 %169, %v157
    %v171 = vpop.permute.xlu0 %170
    %v173 = vmul.f32 %v161, %v152
    %v174 = vmul.f32 %v166, %v153
    %v175 = vmul.f32 %v171, %v154
    %v176 = vadd.f32 %v173, %v174
    %vm177 = vcmask 1043456
    %v178 = vsel %vm177, %v175, 0.0
    %v179 = vadd.f32 %v176, %v178
    %v180 = vrot.slane %v179, 4
    %v181 = vadd.f32 %v179, %v180
    %v182 = vrot.slane %v181, 2
    %v183 = vadd.f32 %v181, %v182
    %v184 = vrot.slane %v183, 1
    %v185 = vadd.f32 %v183, %v184
    %s186 = sld [smem:[#allocation7]]
    %v187 = vstv %s186
    %v188 = vadd.f32 %v185, %v187
    %v189 = vand.u32 2147483647, %v188
    %v190 = vsub.f32 0.0, %v189
    %v191 = vmul.f32 %v190, 1.442695
    %v192 = vpow.pop %v191
    %v193 = vadd.f32 %v192, 1.0
    %v194 = vrcp.pop %v193
    %v195 = vmul.f32 1.0, %v194
    %vm196 = vcmp.ge.f32.partialorder %v188, 0.0
    %v197 = vsub.f32 1.0, %v195
    %v198 = vsel %vm196, %v195, %v197
    %v199 = vsub.f32 1.0, %v198
    %200 = vst [vmem:[%s6] sm:$0x1] %v199
    %201 = vst [vmem:[%s6 + $0x1] sm:$0x1] %v198
    // Predicated region
    $region22: #{policy_forward.2} parent=1 // pred_check
      _
    $region23: #{policy_forward.2} parent=1 // pred_check_branch
      %203 = sbr.rel (0) target = $region25
    $region24: #{policy_forward.2} parent=1 // pred_region
      _
    $region25: #{policy_forward.2} parent=1 // pred_fallthru
      _
    // Predicated region
    $region26: #{policy_forward.2} parent=1 // pred_check
      _
    $region27: #{policy_forward.2} parent=1 // pred_check_branch
      %205 = sbr.rel (0) target = $region29
    $region28: #{policy_forward.2} parent=1 // pred_region
      _
    $region29: #{policy_forward.2} parent=1 // pred_fallthru
      _

</llo_original>
